<compile_context>
chip_gen: v7x
topology: tpu7x:2x2x1
jax: 0.10.0
libtpu: 0.0.40
codegen_flags: <defaults>
</compile_context>

<pallas_src>
import jax
import jax.numpy as jnp
from jax.experimental import pallas as pl
from jax.experimental.pallas import tpu as pltpu


def _round_up(a, b):
    return ((a + b - 1) // b) * b


def _ffn_resident_kernel(x_ref, w1_ref, b1_ref, w2_ref, b2_ref, o_ref):
    # x: (tm, H)   w1: (H, I)   b1: (1, I) f32   w2: (I, H)   b2: (1, H) f32
    # Weights are VMEM-resident (constant block index, Buffered(1)); only the
    # x / out row tiles stream per grid step.
    h = jnp.dot(x_ref[...], w1_ref[...], preferred_element_type=jnp.float32)
    h = jnp.maximum(h + b1_ref[...], 0.0)
    y = jnp.dot(h.astype(w2_ref.dtype), w2_ref[...],
                preferred_element_type=jnp.float32)
    o_ref[...] = (y + b2_ref[...]).astype(o_ref.dtype)


def _ffn_stream_kernel(x_ref, w1_ref, b1_ref, w2_ref, b2_ref, o_ref, acc_ref):
    # x: (tm, H)   w1: (H, tI)   b1: (1, tI)   w2: (tI, H)   b2: (1, H)
    # o: (tm, H)   acc: (tm, H) f32 scratch carried across the k (I) axis.
    k = pl.program_id(1)

    @pl.when(k == 0)
    def _init():
        acc_ref[...] = jnp.zeros_like(acc_ref)

    h = jnp.dot(x_ref[...], w1_ref[...], preferred_element_type=jnp.float32)
    h = jnp.maximum(h + b1_ref[...], 0.0)
    acc_ref[...] += jnp.dot(h.astype(w2_ref.dtype), w2_ref[...],
                            preferred_element_type=jnp.float32)

    @pl.when(k == pl.num_programs(1) - 1)
    def _finalize():
        o_ref[...] = (acc_ref[...] + b2_ref[...]).astype(o_ref.dtype)


def berrrt_ffn(x, w1_t, b1, w2_t, b2, *, tm=512, ti=1024,
               compute_dtype=jnp.bfloat16, resident_weights=None,
               vmem_cap_bytes=40 * 1024 * 1024):
    """Fused FFN: relu(x @ w1_t + b1) @ w2_t + b2.

    x: [B, S, H]; w1_t: [H, I]; b1: [I]; w2_t: [I, H]; b2: [H].
    Weights are stored pre-transposed ([in, out]) relative to nn.Linear.
    compute_dtype: MXU input dtype (default bf16; accumulation is always f32).
      Store the weights in this dtype to make the per-call casts no-ops.
    resident_weights: True = force / False = forbid the VMEM-resident weight
      path; None = auto, based on vmem_cap_bytes (conservative for v7x 64MiB).
    """
    B, S, H = x.shape
    Hw, I = w1_t.shape
    assert Hw == H and w2_t.shape == (I, H) and b1.shape == (I,) and b2.shape == (H,)
    M = B * S

    out_dtype = x.dtype
    cdt = jnp.dtype(compute_dtype)
    csz = cdt.itemsize
    osz = jnp.dtype(out_dtype).itemsize

    x2 = x.reshape(M, H)
    x2 = x2 if x2.dtype == cdt else x2.astype(cdt)
    w1c = w1_t if w1_t.dtype == cdt else w1_t.astype(cdt)
    w2c = w2_t if w2_t.dtype == cdt else w2_t.astype(cdt)
    b1f = b1.astype(jnp.float32).reshape(1, I)
    b2f = b2.astype(jnp.float32).reshape(1, H)

    # ---- M (row) tile: multiple of 8, MXU / megacore friendly ------------
    tm = max(8, tm - tm % 8)
    tm = min(tm, _round_up(M, 8))
    if M >= 512:
        # Keep >=2 row blocks so the "parallel" axis can shard across the two
        # TensorCores on v7x (and pipeline on v5e/v6e).
        tm = min(tm, _round_up(pl.cdiv(M, 2), 256))

    # ---- VMEM-resident weight fast path -----------------------------------
    def _resident_vmem(tm_):
        return (2 * H * I * csz          # W1 + W2, single-buffered
                + 4 * (I + H)            # biases (f32), single-buffered
                + 2 * tm_ * H * csz      # x tile (double-buffered)
                + 2 * tm_ * H * osz      # out tile (double-buffered)
                + tm_ * I * 4            # f32 ReLU intermediate
                + tm_ * I * csz          # compute-dtype copy for 2nd matmul
                + tm_ * H * 4)           # f32 result before bias/cast

    use_resident = resident_weights
    if use_resident is None or use_resident:
        fit_tm = None
        for cand in (tm, 384, 256):
            cand = min(cand, tm)
            if cand >= 8 and _resident_vmem(cand) <= vmem_cap_bytes:
                fit_tm = cand
                break
        if fit_tm is not None:
            tm = fit_tm
            use_resident = True
        elif resident_weights:
            raise ValueError("resident_weights=True but weights do not fit the"
                             " VMEM budget; lower tm or raise vmem_cap_bytes")
        else:
            use_resident = False

    cost_flops = 4 * M * H * I  # two matmuls, 2*M*H*I each

    if use_resident:
        gm = pl.cdiv(M, tm)
        need = _resident_vmem(tm)
        vmem_limit = int(min(max(need + need // 2, 16 << 20), 60 << 20))
        cost = pl.CostEstimate(
            flops=cost_flops, transcendentals=0,
            bytes_accessed=(x2.nbytes + w1c.nbytes + w2c.nbytes
                            + b1f.nbytes + b2f.nbytes + M * H * osz))
        out2 = pl.pallas_call(
            _ffn_resident_kernel,
            out_shape=jax.ShapeDtypeStruct((M, H), out_dtype),
            grid=(gm,),
            in_specs=[
                pl.BlockSpec((tm, H), lambda i: (i, 0)),        # x row tile
                pl.BlockSpec((H, I), lambda i: (0, 0),
                             pipeline_mode=pl.Buffered(1)),     # W1 resident
                pl.BlockSpec((1, I), lambda i: (0, 0),
                             pipeline_mode=pl.Buffered(1)),     # b1 resident
                pl.BlockSpec((I, H), lambda i: (0, 0),
                             pipeline_mode=pl.Buffered(1)),     # W2 resident
                pl.BlockSpec((1, H), lambda i: (0, 0),
                             pipeline_mode=pl.Buffered(1)),     # b2 resident
            ],
            out_specs=pl.BlockSpec((tm, H), lambda i: (i, 0)),
            compiler_params=pltpu.CompilerParams(
                dimension_semantics=("parallel",),
                vmem_limit_bytes=vmem_limit),
            cost_estimate=cost,
        )(x2, w1c, b1f, w2c, b2f)
        return out2.reshape(B, S, H)

    # ---- streaming fallback: tile the I reduction --------------------------
    ti = max(128, ti - ti % 128)
    ti = min(ti, _round_up(I, 128))

    def _stream_vmem(tm_, ti_):
        return (2 * tm_ * H * csz        # x tile
                + 2 * H * ti_ * csz      # W1 I-chunk
                + 2 * ti_ * H * csz      # W2 I-chunk
                + 2 * ti_ * 4            # b1 I-chunk (f32)
                + H * 4                  # b2 (Buffered(1), f32)
                + 2 * tm_ * H * osz      # out tile
                + tm_ * H * 4            # f32 accumulator scratch
                + tm_ * ti_ * 4          # f32 ReLU intermediate
                + tm_ * ti_ * csz)       # compute-dtype copy for 2nd matmul

    need = _stream_vmem(tm, ti)
    while need > vmem_cap_bytes and ti > 256:
        ti = max(128, (ti // 2) - (ti // 2) % 128)
        need = _stream_vmem(tm, ti)
    while need > vmem_cap_bytes and tm > 256:
        tm = max(8, (tm // 2) - (tm // 2) % 8)
        need = _stream_vmem(tm, ti)

    # The reduction axis must be exact (OOB I columns would pollute every
    # output column), so pad the weights along I if it is not ti-aligned.
    # TODO(synk): pre-pad / persist ti-aligned weights outside the call path.
    I_pad = _round_up(I, ti)
    if I_pad != I:
        w1c = jnp.pad(w1c, ((0, 0), (0, I_pad - I)))
        b1f = jnp.pad(b1f, ((0, 0), (0, I_pad - I)))
        w2c = jnp.pad(w2c, ((0, I_pad - I), (0, 0)))

    gm = pl.cdiv(M, tm)
    gk = I_pad // ti
    vmem_limit = int(min(max(need + need // 2, 16 << 20), 60 << 20))
    cost = pl.CostEstimate(
        flops=cost_flops, transcendentals=0,
        # Weights are re-streamed once per M tile in this path.
        bytes_accessed=(x2.nbytes + b2f.nbytes + M * H * osz
                        + gm * (w1c.nbytes + w2c.nbytes + b1f.nbytes)))

    out2 = pl.pallas_call(
        _ffn_stream_kernel,
        out_shape=jax.ShapeDtypeStruct((M, H), out_dtype),
        grid=(gm, gk),
        in_specs=[
            pl.BlockSpec((tm, H), lambda i, k: (i, 0)),    # x row tile
            pl.BlockSpec((H, ti), lambda i, k: (0, k)),    # W1 I-chunk
            pl.BlockSpec((1, ti), lambda i, k: (0, k)),    # b1 I-chunk
            pl.BlockSpec((ti, H), lambda i, k: (k, 0)),    # W2 I-chunk
            pl.BlockSpec((1, H), lambda i, k: (0, 0),
                         pipeline_mode=pl.Buffered(1)),    # b2 (grid-invariant)
        ],
        out_specs=pl.BlockSpec((tm, H), lambda i, k: (i, 0)),
        scratch_shapes=[pltpu.VMEM((tm, H), jnp.float32)],
        compiler_params=pltpu.CompilerParams(
            dimension_semantics=("parallel", "arbitrary"),
            vmem_limit_bytes=vmem_limit),
        cost_estimate=cost,
    )(x2, w1c, b1f, w2c, b2f)
    return out2.reshape(B, S, H)


def init_params(key, hidden_size, intermediate_size, dtype=jnp.float32):
    # Deterministic init mimicking nn.Linear's uniform(-1/sqrt(fan_in), ...).
    k1, k2, k3, k4 = jax.random.split(key, 4)
    lim1 = 1.0 / (hidden_size ** 0.5)
    lim2 = 1.0 / (intermediate_size ** 0.5)
    # Stored as [in, out] (i.e. PyTorch weight transposed).
    w1_t = jax.random.uniform(k1, (hidden_size, intermediate_size),
                              dtype, minval=-lim1, maxval=lim1)
    b1 = jax.random.uniform(k2, (intermediate_size,), dtype,
                            minval=-lim1, maxval=lim1)
    w2_t = jax.random.uniform(k3, (intermediate_size, hidden_size),
                              dtype, minval=-lim2, maxval=lim2)
    b2 = jax.random.uniform(k4, (hidden_size,), dtype,
                            minval=-lim2, maxval=lim2)
    return w1_t, b1, w2_t, b2


if __name__ == "__main__":
    key = jax.random.PRNGKey(0)
    kx, kp, k2, k3 = jax.random.split(key, 4)

    # --- Test 1: toy module shapes, f32 compute, resident-weight path -----
    batch, seq, hidden, intermediate = 2, 8, 32, 128
    x = jax.random.normal(kx, (batch, seq, hidden), jnp.float32)
    w1_t, b1, w2_t, b2 = init_params(kp, hidden, intermediate, jnp.float32)
    out = jax.block_until_ready(
        berrrt_ffn(x, w1_t, b1, w2_t, b2, compute_dtype=jnp.float32))
    ref = jnp.maximum(x @ w1_t + b1, 0.0) @ w2_t + b2
    assert out.shape == (batch, seq, hidden)
    assert jnp.allclose(out, ref, atol=1e-4, rtol=1e-4), "toy f32 mismatch"

    # --- Test 2: streaming fallback, ragged M, multi-step I reduction -----
    B2, S2, H2, I2 = 4, 160, 128, 512      # M=640 -> 2 row tiles, last ragged
    xb = jax.random.normal(k2, (B2, S2, H2), jnp.float32)
    w1b, b1b, w2b, b2b = init_params(jax.random.fold_in(k2, 1), H2, I2,
                                     jnp.float32)
    outb = jax.block_until_ready(
        berrrt_ffn(xb, w1b, b1b, w2b, b2b, ti=256,
                   compute_dtype=jnp.float32, resident_weights=False))
    refb = jnp.maximum(xb @ w1b + b1b, 0.0) @ w2b + b2b
    assert outb.shape == (B2, S2, H2)
    assert jnp.allclose(outb, refb, atol=2e-4, rtol=2e-4), "stream f32 mismatch"

    # --- Test 3: default bf16 compute dtype, VMEM-resident weights --------
    B3, S3, H3, I3 = 2, 128, 256, 1024
    xc = jax.random.normal(k3, (B3, S3, H3), jnp.float32)
    w1q, b1q, w2q, b2q = init_params(jax.random.fold_in(k3, 1), H3, I3,
                                     jnp.bfloat16)
    outc = jax.block_until_ready(berrrt_ffn(xc, w1q, b1q, w2q, b2q))
    xq = xc.astype(jnp.bfloat16).astype(jnp.float32)
    hq = jnp.maximum(xq @ w1q.astype(jnp.float32) + b1q.astype(jnp.float32), 0.0)
    refc = (hq.astype(jnp.bfloat16).astype(jnp.float32)
            @ w2q.astype(jnp.float32) + b2q.astype(jnp.float32))
    assert outc.shape == (B3, S3, H3)
    assert jnp.allclose(outc, refc, atol=2e-2, rtol=2e-2), "bf16 mismatch"

    print("KERNEL_OK")
</pallas_src>

<mosaic_0001>
module attributes {stable_mosaic.version = 11 : i64} {
  func.func @_ffn_resident_kernel(%arg0: i32, %arg1: memref<16x32xf32, #tpu.memory_space<vmem>>, %arg2: memref<32x128xf32, #tpu.memory_space<vmem>>, %arg3: memref<1x128xf32, #tpu.memory_space<vmem>>, %arg4: memref<128x32xf32, #tpu.memory_space<vmem>>, %arg5: memref<1x32xf32, #tpu.memory_space<vmem>>, %arg6: memref<16x32xf32, #tpu.memory_space<vmem>>) attributes {dimension_semantics = [#tpu.dimension_semantics<parallel>], iteration_bounds = array<i64: 1>, scalar_prefetch = 0 : i64, scratch_operands = 0 : i64, tpu.core_type = #tpu.core_type<tc>, window_params = [{transform_indices = @transform_0, window_bounds = array<i64: 16, 32>}, {pipeline_mode = #tpu.pipeline_mode<synchronous>, transform_indices = @transform_1, window_bounds = array<i64: 32, 128>}, {pipeline_mode = #tpu.pipeline_mode<synchronous>, transform_indices = @transform_2, window_bounds = array<i64: 1, 128>}, {pipeline_mode = #tpu.pipeline_mode<synchronous>, transform_indices = @transform_3, window_bounds = array<i64: 128, 32>}, {pipeline_mode = #tpu.pipeline_mode<synchronous>, transform_indices = @transform_4, window_bounds = array<i64: 1, 32>}, {transform_indices = @transform_5, window_bounds = array<i64: 16, 32>}]} {
    %c0 = arith.constant 0 : index
    %c0_0 = arith.constant 0 : index
    %0 = vector.load %arg1[%c0, %c0_0] : memref<16x32xf32, #tpu.memory_space<vmem>>, vector<16x32xf32>
    %c0_1 = arith.constant 0 : index
    %c0_2 = arith.constant 0 : index
    %1 = vector.load %arg2[%c0_1, %c0_2] : memref<32x128xf32, #tpu.memory_space<vmem>>, vector<32x128xf32>
    %cst = arith.constant dense<0.000000e+00> : vector<16x128xf32>
    %2 = tpu.matmul %0, %1, %cst {dimension_numbers = #tpu.dot_dimension_numbers<[1], [0], [0], [1], [0, 0, 1, 1], [], []>} : vector<16x32xf32>, vector<32x128xf32>, vector<16x128xf32> -> vector<16x128xf32>
    %c0_3 = arith.constant 0 : index
    %c0_4 = arith.constant 0 : index
    %3 = vector.load %arg3[%c0_3, %c0_4] : memref<1x128xf32, #tpu.memory_space<vmem>>, vector<1x128xf32>
    %4 = vector.broadcast %3 : vector<1x128xf32> to vector<16x128xf32>
    %5 = arith.addf %2, %4 : vector<16x128xf32>
    %cst_5 = arith.constant 0.000000e+00 : f32
    %6 = vector.broadcast %cst_5 : f32 to vector<16x128xf32>
    %7 = arith.maximumf %5, %6 : vector<16x128xf32>
    %c0_6 = arith.constant 0 : index
    %c0_7 = arith.constant 0 : index
    %8 = vector.load %arg4[%c0_6, %c0_7] : memref<128x32xf32, #tpu.memory_space<vmem>>, vector<128x32xf32>
    %cst_8 = arith.constant dense<0.000000e+00> : vector<16x32xf32>
    %9 = tpu.matmul %7, %8, %cst_8 {dimension_numbers = #tpu.dot_dimension_numbers<[1], [0], [0], [1], [0, 0, 1, 1], [], []>} : vector<16x128xf32>, vector<128x32xf32>, vector<16x32xf32> -> vector<16x32xf32>
    %c0_9 = arith.constant 0 : index
    %c0_10 = arith.constant 0 : index
    %10 = vector.load %arg5[%c0_9, %c0_10] : memref<1x32xf32, #tpu.memory_space<vmem>>, vector<1x32xf32>
    %11 = vector.broadcast %10 : vector<1x32xf32> to vector<16x32xf32>
    %12 = arith.addf %9, %11 : vector<16x32xf32>
    %c0_11 = arith.constant 0 : index
    %c0_12 = arith.constant 0 : index
    %13 = vector.load %arg6[%c0_11, %c0_12] : memref<16x32xf32, #tpu.memory_space<vmem>>, vector<16x32xf32>
    tpu.vector_store %arg6[%c0_11, %c0_12], %12 {strides = array<i32>} : memref<16x32xf32, #tpu.memory_space<vmem>>, vector<16x32xf32>,
    return
  }
  func.func @transform_0(%arg0: i32) -> (i32, i32) {
    %c0_i32 = arith.constant 0 : i32
    %c0_i32_0 = arith.constant 0 : i32
    return %arg0, %c0_i32 : i32, i32
  }
  func.func @transform_1(%arg0: i32) -> (i32, i32) {
    %c0_i32 = arith.constant 0 : i32
    %c0_i32_0 = arith.constant 0 : i32
    %c0_i32_1 = arith.constant 0 : i32
    return %c0_i32, %c0_i32_0 : i32, i32
  }
  func.func @transform_2(%arg0: i32) -> (i32, i32) {
    %c0_i32 = arith.constant 0 : i32
    %c0_i32_0 = arith.constant 0 : i32
    %c0_i32_1 = arith.constant 0 : i32
    return %c0_i32, %c0_i32_0 : i32, i32
  }
  func.func @transform_3(%arg0: i32) -> (i32, i32) {
    %c0_i32 = arith.constant 0 : i32
    %c0_i32_0 = arith.constant 0 : i32
    %c0_i32_1 = arith.constant 0 : i32
    return %c0_i32, %c0_i32_0 : i32, i32
  }
  func.func @transform_4(%arg0: i32) -> (i32, i32) {
    %c0_i32 = arith.constant 0 : i32
    %c0_i32_0 = arith.constant 0 : i32
    %c0_i32_1 = arith.constant 0 : i32
    return %c0_i32, %c0_i32_0 : i32, i32
  }
  func.func @transform_5(%arg0: i32) -> (i32, i32) {
    %c0_i32 = arith.constant 0 : i32
    %c0_i32_0 = arith.constant 0 : i32
    return %arg0, %c0_i32 : i32, i32
  }
}

</mosaic_0001>

<llo_original>
// kernel: tpu_custom_call.1
$region0: #{tpu_custom_call.1}
  #allocation0 [shape = 'u32[]', space=smem, size = 0x4, offset = 0x4, fixed_abs, tag = 'smem constant byte address 0x4 - core index']
  #allocation1 [shape = 'u32[144,128]{1,0:T(1,128)}', space=vmem, size = 0x12000, scoped, tag = 'internal scratch']
  %s0 = inlined_call_operand.vmem [shape: f32[16,32], index: 0, kind: input, shape index: {}]
  %s1 = inlined_call_operand.vmem [shape: f32[32,128], index: 1, kind: input, shape index: {}]
  %s2 = inlined_call_operand.vmem [shape: f32[1,128], index: 2, kind: input, shape index: {}]
  %s3 = inlined_call_operand.vmem [shape: f32[128,32], index: 3, kind: input, shape index: {}]
  %s4 = inlined_call_operand.vmem [shape: f32[1,32], index: 4, kind: input, shape index: {}]
  %s5 = inlined_call_operand.hbm [shape: f32[16,32], index: 5, kind: output, shape index: {}]
  %s6 = sld [smem:[#allocation0]]
  $region30: #{tpu_custom_call.1} parent=0
    _
  %s8 = ssub.s32 1, %s6
  %s9 = scalar_select 0, %s8, %s6
  $region1: #{tpu_custom_call.1} parent=0
    #allocation2 [shape = 'u8[8192]{0}', space=vmem, size = 0x2000, scoped, tag = 'output window, operand 0, single buffered']
    #allocation3 [shape = 's32[1]{0}', space=sflag, size = 0x4, scoped, tag = 'scoped memory for tpu_custom_call.1']
    %10 = vsyncpa [#allocation3], 0
    // Predicated region
    $region2: #{tpu_custom_call.1} parent=1 // pred_check
      _
    $region3: #{tpu_custom_call.1} parent=1 // pred_check_branch
      %12 = sbr.rel (0) target = $region5
    $region4: #{tpu_custom_call.1} parent=1 // pred_region
      _
    $region5: #{tpu_custom_call.1} parent=1 // pred_fallthru
      _
    // Predicated region
    $region6: #{tpu_custom_call.1} parent=1 // pred_check
      _
    $region7: #{tpu_custom_call.1} parent=1 // pred_check_branch
      %14 = sbr.rel (0) target = $region9
    $region8: #{tpu_custom_call.1} parent=1 // pred_region
      _
    $region9: #{tpu_custom_call.1} parent=1 // pred_fallthru
      _
    // Predicated region
    $region10: #{tpu_custom_call.1} parent=1 // pred_check
      _
    $region11: #{tpu_custom_call.1} parent=1 // pred_check_branch
      %16 = sbr.rel (0) target = $region13
    $region12: #{tpu_custom_call.1} parent=1 // pred_region
      _
    $region13: #{tpu_custom_call.1} parent=1 // pred_fallthru
      _
    // Predicated region
    $region14: #{tpu_custom_call.1} parent=1 // pred_check
      _
    $region15: #{tpu_custom_call.1} parent=1 // pred_check_branch
      %18 = sbr.rel (0) target = $region17
    $region16: #{tpu_custom_call.1} parent=1 // pred_region
      _
    $region17: #{tpu_custom_call.1} parent=1 // pred_fallthru
      _
    // Predicated region
    $region18: #{tpu_custom_call.1} parent=1 // pred_check
      _
    $region19: #{tpu_custom_call.1} parent=1 // pred_check_branch
      %20 = sbr.rel (0) target = $region21
    $region20: #{tpu_custom_call.1} parent=1 // pred_region
      _
    $region21: #{tpu_custom_call.1} parent=1 // pred_fallthru
      _
    %v21 = vld [vmem:[%s0] sm:$0xff]
    %v22 = vld [vmem:[%s0 + $0x8] sm:$0xff]
    %v23 = vld [vmem:[%s1] sm:$0xff]
    %v24 = vld [vmem:[%s1 + $0x8] sm:$0xff]
    %v25 = vld [vmem:[%s1 + $0x10] sm:$0xff]
    %v26 = vld [vmem:[%s1 + $0x18] sm:$0xff]
    %v27 = vld [vmem:[%s2] sm:$0x1]
    %v29 = vlaneseq
    %v30 = vshrl.u32 %v29, 7
    %v31 = vsub.s32 0, %v30
    %v32 = vrot.slane %v27, %v31
    %vm34 = vcmask 261120
    %v36 = vsel %vm34, %v21, 0
    %v39 = vsel %vm34, %v22, 0
    %41 = vmatprep.subr.mxu0 0.0
    %42 = vmatpush1.msra.mxu0 %v23
    %43 = vmatprep.subr.mxu0 0.0
    %44 = vmatpush1.msra.mxu0 %v24
    %45 = vmatprep.subr.mxu0 0.0
    %46 = vmatpush1.msra.mxu0 %v25
    %47 = vmatprep.subr.mxu0 0.0
    %48 = vmatpush1.msra.mxu0 %v26
    %49 = vmatprep.subr.mxu0 0.0
    %50 = vmatpush1.msra.mxu0 0.0
    %51 = vmatprep.subr.mxu0 0.0
    %52 = vmatpush1.msra.mxu0 0.0
    %53 = vmatprep.subr.mxu0 0.0
    %54 = vmatpush1.msra.mxu0 0.0
    %55 = vmatprep.subr.mxu0 0.0
    %56 = vmatpush1.msra.mxu0 0.0
    %57 = vmatprep.subr.mxu0 0.0
    %58 = vmatpush1.msra.mxu0 0.0
    %59 = vmatprep.subr.mxu0 0.0
    %60 = vmatpush1.msra.mxu0 0.0
    %61 = vmatprep.subr.mxu0 0.0
    %62 = vmatpush1.msra.mxu0 0.0
    %63 = vmatprep.subr.mxu0 0.0
    %64 = vmatpush1.msra.mxu0 0.0
    %65 = vmatprep.subr.mxu0 0.0
    %66 = vmatpush1.msra.mxu0 0.0
    %67 = vmatprep.subr.mxu0 0.0
    %68 = vmatpush1.msra.mxu0 0.0
    %69 = vmatprep.subr.mxu0 0.0
    %70 = vmatpush1.msra.mxu0 0.0
    %71 = vmatprep.subr.mxu0 0.0
    %72 = vmatpush1.msra.mxu0 0.0
    %73 = vmatprep.subr.mxu0 0.0
    %74 = vmatpush1.msra.mxu0 0.0
    %75 = vmatprep.subr.mxu0 0.0
    %76 = vmatpush1.msra.mxu0 0.0
    %77 = vmatprep.subr.mxu0 0.0
    %78 = vmatpush1.msra.mxu0 0.0
    %79 = vmatprep.subr.mxu0 0.0
    %80 = vmatpush1.msra.mxu0 0.0
    %81 = vmatprep.subr.mxu0 0.0
    %82 = vmatpush1.msra.mxu0 0.0
    %83 = vmatprep.subr.mxu0 0.0
    %84 = vmatpush1.msra.mxu0 0.0
    %85 = vmatprep.subr.mxu0 0.0
    %86 = vmatpush1.msra.mxu0 0.0
    %87 = vmatprep.subr.mxu0 0.0
    %88 = vmatpush1.msra.mxu0 0.0
    %89 = vmatprep.subr.mxu0 0.0
    %90 = vmatpush1.msra.mxu0 0.0
    %91 = vmatprep.subr.mxu0 0.0
    %92 = vmatpush1.msra.mxu0 0.0
    %93 = vmatprep.subr.mxu0 0.0
    %94 = vmatpush1.msra.mxu0 0.0
    %95 = vmatprep.subr.mxu0 0.0
    %96 = vmatpush1.msra.mxu0 0.0
    %97 = vmatprep.subr.mxu0 0.0
    %98 = vmatpush1.msra.mxu0 0.0
    %99 = vmatprep.subr.mxu0 0.0
    %100 = vmatpush1.msra.mxu0 0.0
    %101 = vmatprep.subr.mxu0 0.0
    %102 = vmatpush1.msra.mxu0 0.0
    %103 = vmatprep.subr.mxu0 0.0
    %104 = vmatpush1.msra.mxu0 0.0
    %105 = vmatprep.mubr.f32.mxu0 0.0
    %106 = vmatmul.mubr.f32.gmra.mrb[0].mxu0 %v36
    %v107 = vpop.f32.mrb[0].mxu0
    %v108 = vadd.f32 %v32, %v107
    %v109 = vpop.f32.mrb[0].mxu0
    %110 = vmatprep.mubr.f32.mxu0 0.0
    %111 = vmatmul.mubr.f32.gmra.mrb[0].mxu0 %v39
    %v112 = vpop.f32.mrb[0].mxu0
    %v113 = vadd.f32 %v32, %v112
    %v114 = vpop.f32.mrb[0].mxu0
    %115 = vdwg.mxu0
    %v116 = vmax.f32 %v108, 0.0
    %v117 = vmax.f32 %v113, 0.0
    %v118 = vld [vmem:[%s3] sm:$0xff]
    %v119 = vld [vmem:[%s3 + $0x8] sm:$0xff]
    %v120 = vld [vmem:[%s3 + $0x10] sm:$0xff]
    %v121 = vld [vmem:[%s3 + $0x18] sm:$0xff]
    %v122 = vld [vmem:[%s3 + $0x20] sm:$0xff]
    %v123 = vld [vmem:[%s3 + $0x28] sm:$0xff]
    %v124 = vld [vmem:[%s3 + $0x30] sm:$0xff]
    %v125 = vld [vmem:[%s3 + $0x38] sm:$0xff]
    %v126 = vld [vmem:[%s3 + $0x40] sm:$0xff]
    %v127 = vld [vmem:[%s3 + $0x48] sm:$0xff]
    %v128 = vld [vmem:[%s3 + $0x50] sm:$0xff]
    %v129 = vld [vmem:[%s3 + $0x58] sm:$0xff]
    %v130 = vld [vmem:[%s3 + $0x60] sm:$0xff]
    %v131 = vld [vmem:[%s3 + $0x68] sm:$0xff]
    %v132 = vld [vmem:[%s3 + $0x70] sm:$0xff]
    %v133 = vld [vmem:[%s3 + $0x78] sm:$0xff]
    %v134 = vld [vmem:[%s4] sm:$0x1]
    %v136 = vlaneseq
    %v137 = vshrl.u32 %v136, 7
    %v138 = vsub.s32 0, %v137
    %v139 = vrot.slane %v134, %v138
    %141 = vmatprep.subr.mxu0 0.0
    %142 = vmatpush1.msra.mxu0 %v118
    %143 = vmatprep.subr.mxu0 0.0
    %144 = vmatpush1.msra.mxu0 %v119
    %145 = vmatprep.subr.mxu0 0.0
    %146 = vmatpush1.msra.mxu0 %v120
    %147 = vmatprep.subr.mxu0 0.0
    %148 = vmatpush1.msra.mxu0 %v121
    %149 = vmatprep.subr.mxu0 0.0
    %150 = vmatpush1.msra.mxu0 %v122
    %151 = vmatprep.subr.mxu0 0.0
    %152 = vmatpush1.msra.mxu0 %v123
    %153 = vmatprep.subr.mxu0 0.0
    %154 = vmatpush1.msra.mxu0 %v124
    %155 = vmatprep.subr.mxu0 0.0
    %156 = vmatpush1.msra.mxu0 %v125
    %157 = vmatprep.subr.mxu0 0.0
    %158 = vmatpush1.msra.mxu0 %v126
    %159 = vmatprep.subr.mxu0 0.0
    %160 = vmatpush1.msra.mxu0 %v127
    %161 = vmatprep.subr.mxu0 0.0
    %162 = vmatpush1.msra.mxu0 %v128
    %163 = vmatprep.subr.mxu0 0.0
    %164 = vmatpush1.msra.mxu0 %v129
    %165 = vmatprep.subr.mxu0 0.0
    %166 = vmatpush1.msra.mxu0 %v130
    %167 = vmatprep.subr.mxu0 0.0
    %168 = vmatpush1.msra.mxu0 %v131
    %169 = vmatprep.subr.mxu0 0.0
    %170 = vmatpush1.msra.mxu0 %v132
    %171 = vmatprep.subr.mxu0 0.0
    %172 = vmatpush1.msra.mxu0 %v133
    %173 = vmatprep.subr.mxu0 0.0
    %174 = vmatpush1.msra.mxu0 0.0
    %175 = vmatprep.subr.mxu0 0.0
    %176 = vmatpush1.msra.mxu0 0.0
    %177 = vmatprep.subr.mxu0 0.0
    %178 = vmatpush1.msra.mxu0 0.0
    %179 = vmatprep.subr.mxu0 0.0
    %180 = vmatpush1.msra.mxu0 0.0
    %181 = vmatprep.subr.mxu0 0.0
    %182 = vmatpush1.msra.mxu0 0.0
    %183 = vmatprep.subr.mxu0 0.0
    %184 = vmatpush1.msra.mxu0 0.0
    %185 = vmatprep.subr.mxu0 0.0
    %186 = vmatpush1.msra.mxu0 0.0
    %187 = vmatprep.subr.mxu0 0.0
    %188 = vmatpush1.msra.mxu0 0.0
    %189 = vmatprep.subr.mxu0 0.0
    %190 = vmatpush1.msra.mxu0 0.0
    %191 = vmatprep.subr.mxu0 0.0
    %192 = vmatpush1.msra.mxu0 0.0
    %193 = vmatprep.subr.mxu0 0.0
    %194 = vmatpush1.msra.mxu0 0.0
    %195 = vmatprep.subr.mxu0 0.0
    %196 = vmatpush1.msra.mxu0 0.0
    %197 = vmatprep.subr.mxu0 0.0
    %198 = vmatpush1.msra.mxu0 0.0
    %199 = vmatprep.subr.mxu0 0.0
    %200 = vmatpush1.msra.mxu0 0.0
    %201 = vmatprep.subr.mxu0 0.0
    %202 = vmatpush1.msra.mxu0 0.0
    %203 = vmatprep.subr.mxu0 0.0
    %204 = vmatpush1.msra.mxu0 0.0
    %205 = vmatprep.mubr.f32.mxu0 0.0
    %206 = vmatmul.mubr.f32.gmra.mrb[0].mxu0 %v116
    %v207 = vpop.f32.mrb[0].mxu0
    %v208 = vadd.f32 %v139, %v207
    %v209 = vpop.f32.mrb[0].mxu0
    %210 = vmatprep.mubr.f32.mxu0 0.0
    %211 = vmatmul.mubr.f32.gmra.mrb[0].mxu0 %v117
    %v212 = vpop.f32.mrb[0].mxu0
    %v213 = vadd.f32 %v139, %v212
    %v214 = vpop.f32.mrb[0].mxu0
    %215 = vdwg.mxu0
    %216 = vst.msk [vmem:[#allocation2] sm:$0xff] %vm34, %v208
    %217 = vst.msk [vmem:[#allocation2 + $0x8] sm:$0xff] %vm34, %v213
    // Predicated region
    $region22: #{tpu_custom_call.1} parent=1 // pred_check
      _
    $region23: #{tpu_custom_call.1} parent=1 // pred_check_branch
      %219 = sbr.rel (0) target = $region25
    $region24: #{tpu_custom_call.1} parent=1 // pred_region
      %s221 = ssub.s32 256, 256
      %222 = vsyncadd [#allocation3], %s221
      %s223 = sshll.u32 [#allocation2], 4
      %s224 = int_to_ptr.vmem [resolvable:$true] %s223
      %229 = dma.vmem_to_hbm [thread:$0]  %s224, 256, %s5, [#allocation3], 128, 128, 8
    $region25: #{tpu_custom_call.1} parent=1 // pred_fallthru
      _
    // Predicated region
    $region26: #{tpu_custom_call.1} parent=1 // pred_check
      _
    $region27: #{tpu_custom_call.1} parent=1 // pred_check_branch
      %231 = sbr.rel (0) target = $region29
    $region28: #{tpu_custom_call.1} parent=1 // pred_region
      %232 = dma.done [#allocation3], 256
    $region29: #{tpu_custom_call.1} parent=1 // pred_fallthru
      _
    %233 = vsyncpa [#allocation3], 1

</llo_original>
